<compile_context>
chip_gen: v6e
topology: v6e:2x2x1
jax: 0.10.0
libtpu: 0.0.40
codegen_flags: <defaults>
</compile_context>

<pallas_src>
import functools

import jax
import jax.numpy as jnp
from jax.experimental import pallas as pl
from jax.experimental.pallas import tpu as pltpu


def _round_up(x, m):
    return (x + m - 1) // m * m


def _policy_kernel(log_std_min, log_std_max, action_dim, hidden, head_lanes,
                   x_ref, w1_ref, bias_ref, w2wh_hbm, out_ref,
                   w2wh_vmem, dma_sem):
    """Fused MLP: relu(x@W1+b1) -> relu(.@W2+b2) -> fused mean||log_std head.

    fc1 runs in f32 (tiny K, keeps input precision); fc2 / head use bf16 MXU
    operands with f32 accumulation.  The bulk (w2||wh) weight slab is DMA'd
    manually and hidden behind the fc1 GEMM.
    """
    # 1) Kick off the bulk weight DMA immediately (gridless call -> the auto
    #    pipeline has nothing to overlap with, so we do it by hand).
    cp = pltpu.make_async_copy(w2wh_hbm, w2wh_vmem, dma_sem)
    cp.start()

    # Packed bias slab: row 0 = b1, row 1 = b2, row 2[:head_lanes] = bh.
    bias = bias_ref[...]                                   # (3, hidden) f32
    b1 = bias[0:1, :]
    b2 = bias[1:2, :]
    bh = bias[2:3, :head_lanes]

    # fc1 + ReLU (f32 operands, f32 accumulation; w1 is tiny and auto-DMA'd).
    h = jnp.dot(x_ref[...], w1_ref[...],
                preferred_element_type=jnp.float32) + b1
    h = jnp.maximum(h, 0.0)
    hb = h.astype(jnp.bfloat16)

    # 2) Wait for w2||wh, then fc2 + ReLU and the fused head GEMM.
    cp.wait()
    h = jnp.dot(hb, w2wh_vmem[:, :hidden],
                preferred_element_type=jnp.float32) + b2
    h = jnp.maximum(h, 0.0)

    head = jnp.dot(h.astype(jnp.bfloat16),
                   w2wh_vmem[:, hidden:hidden + head_lanes],
                   preferred_element_type=jnp.float32) + bh

    # clamp only the log_std columns [action_dim, 2*action_dim)
    col = jax.lax.broadcasted_iota(jnp.int32, head.shape, dimension=1)
    is_log_std = jnp.logical_and(col >= action_dim, col < 2 * action_dim)
    head = jnp.where(is_log_std,
                     jnp.clip(head, log_std_min, log_std_max),
                     head)

    out_ref[...] = head.astype(out_ref.dtype)


def pack_params(params):
    """Repack f32 params into the kernel's fused slabs.

    - w1 stays f32 (fc1 runs in f32),
    - w2 and the mean/log_std heads are concatenated column-wise into ONE
      lane-dense (hidden, hidden + 128) bf16 slab,
    - b1/b2/bh are packed into ONE (3, hidden) f32 bias slab
      (row 2: lanes [0,action_dim)=bm, [action_dim,2*action_dim)=bs, rest 0).
    Returns (arrays_dict, static_meta_dict).
    """
    w1 = jnp.asarray(params["w1"], jnp.float32)            # (state_dim, hidden)
    state_dim, hidden = w1.shape
    action_dim = params["wm"].shape[1]
    head_lanes = max(_round_up(2 * action_dim, 128), 128)

    w2wh = jnp.zeros((hidden, hidden + head_lanes), jnp.float32)
    w2wh = w2wh.at[:, :hidden].set(jnp.asarray(params["w2"], jnp.float32))
    w2wh = w2wh.at[:, hidden:hidden + action_dim].set(
        jnp.asarray(params["wm"], jnp.float32))
    w2wh = w2wh.at[:, hidden + action_dim:hidden + 2 * action_dim].set(
        jnp.asarray(params["ws"], jnp.float32))

    bias = jnp.zeros((3, hidden), jnp.float32)
    bias = bias.at[0, :].set(jnp.asarray(params["b1"], jnp.float32).reshape(-1))
    bias = bias.at[1, :].set(jnp.asarray(params["b2"], jnp.float32).reshape(-1))
    bias = bias.at[2, :action_dim].set(
        jnp.asarray(params["bm"], jnp.float32).reshape(-1))
    bias = bias.at[2, action_dim:2 * action_dim].set(
        jnp.asarray(params["bs"], jnp.float32).reshape(-1))

    packed = dict(w1=w1, bias=bias, w2wh=w2wh.astype(jnp.bfloat16))
    meta = dict(state_dim=state_dim, action_dim=action_dim, hidden=hidden,
                head_lanes=head_lanes)
    return packed, meta


def gaussian_policy_forward(state, packed, meta, *,
                            log_std_min=-20.0, log_std_max=2.0):
    """Runs the fused Pallas kernel.  state: (B, state_dim) f32.

    Returns the packed lane-dense (B, head_lanes) head slab:
      lanes [0, action_dim)              -> mean
      lanes [action_dim, 2*action_dim)   -> clamped log_std
    Downstream consumers should take the slab directly; use split_head() only
    if separate arrays are truly needed (it costs extra slice launches).
    """
    B, s_in = state.shape
    assert s_in == meta["state_dim"], (
        f"state has {s_in} features, params expect {meta['state_dim']}")
    action_dim = meta["action_dim"]
    hidden = meta["hidden"]
    head_lanes = meta["head_lanes"]

    kernel = functools.partial(_policy_kernel, float(log_std_min),
                               float(log_std_max), int(action_dim),
                               int(hidden), int(head_lanes))

    flops = 2 * B * (s_in * hidden + hidden * hidden + hidden * head_lanes)
    bytes_accessed = (state.size * 4 + packed["w1"].size * 4
                      + packed["bias"].size * 4 + packed["w2wh"].size * 2
                      + B * head_lanes * 4)

    vmem = pl.BlockSpec(memory_space=pltpu.MemorySpace.VMEM)
    out = pl.pallas_call(
        kernel,
        out_shape=jax.ShapeDtypeStruct((B, head_lanes), jnp.float32),
        in_specs=[vmem, vmem, vmem, pl.BlockSpec(memory_space=pl.ANY)],
        out_specs=vmem,
        scratch_shapes=[
            pltpu.VMEM((hidden, hidden + head_lanes), jnp.bfloat16),
            pltpu.SemaphoreType.DMA(()),
        ],
        cost_estimate=pl.CostEstimate(flops=flops, transcendentals=0,
                                      bytes_accessed=bytes_accessed),
    )(state, packed["w1"], packed["bias"], packed["w2wh"])
    return out


def split_head(head, action_dim):
    """One narrowing slice, then split.  Prefer consuming the packed slab."""
    ml = head[:, :2 * action_dim]
    return ml[:, :action_dim], ml[:, action_dim:]


def init_params(key, state_dim=6, action_dim=2, hidden_dim=256):
    """Deterministic init mimicking torch.nn.Linear default (U[-1/sqrt(fan_in), +])."""
    def linear(k, fan_in, fan_out):
        kw, kb = jax.random.split(k)
        bound = 1.0 / jnp.sqrt(fan_in)
        w = jax.random.uniform(kw, (fan_in, fan_out), jnp.float32, -bound, bound)
        b = jax.random.uniform(kb, (1, fan_out), jnp.float32, -bound, bound)
        return w, b

    k1, k2, k3, k4 = jax.random.split(key, 4)
    w1, b1 = linear(k1, state_dim, hidden_dim)
    w2, b2 = linear(k2, hidden_dim, hidden_dim)
    wm, bm = linear(k3, hidden_dim, action_dim)
    ws, bs = linear(k4, hidden_dim, action_dim)
    return dict(w1=w1, b1=b1, w2=w2, b2=b2, wm=wm, bm=bm, ws=ws, bs=bs)


def _reference_forward_f32(state, params, log_std_min=-20.0, log_std_max=2.0):
    """Full-precision reference (semantics of the original PyTorch module)."""
    h = jnp.maximum(state @ params["w1"] + params["b1"], 0.0)
    h = jnp.maximum(h @ params["w2"] + params["b2"], 0.0)
    mean = h @ params["wm"] + params["bm"]
    log_std = jnp.clip(h @ params["ws"] + params["bs"], log_std_min, log_std_max)
    return mean, log_std


def _reference_forward_kernel_math(state, params,
                                   log_std_min=-20.0, log_std_max=2.0):
    """Same arithmetic as the kernel: f32 fc1, bf16 MXU operands + f32 acc after."""
    bf = jnp.bfloat16

    def mm(a, w):
        return jnp.dot(a.astype(bf), w.astype(bf),
                       preferred_element_type=jnp.float32)

    h = jnp.maximum(jnp.dot(state, params["w1"],
                            preferred_element_type=jnp.float32)
                    + params["b1"], 0.0)
    h = jnp.maximum(mm(h, params["w2"]) + params["b2"], 0.0)
    mean = mm(h, params["wm"]) + params["bm"]
    log_std = jnp.clip(mm(h, params["ws"]) + params["bs"],
                       log_std_min, log_std_max)
    return mean, log_std


if __name__ == "__main__":
    key = jax.random.PRNGKey(0)
    k_params, k_state = jax.random.split(key)

    B, state_dim, action_dim, hidden_dim = 8, 6, 2, 256
    params = init_params(k_params, state_dim, action_dim, hidden_dim)
    state = jax.random.normal(k_state, (B, state_dim), jnp.float32)

    packed, meta = pack_params(params)
    head = gaussian_policy_forward(state, packed, meta)
    jax.block_until_ready(head)

    mean, log_std = split_head(head, action_dim)
    assert mean.shape == (B, action_dim) and log_std.shape == (B, action_dim)

    # tight check against a reference doing the same f32-fc1 / bf16-operand math
    mean_k, log_std_k = _reference_forward_kernel_math(state, params)
    assert jnp.allclose(mean, mean_k, atol=2e-3, rtol=2e-3)
    assert jnp.allclose(log_std, log_std_k, atol=2e-3, rtol=2e-3)

    # loose sanity check against the full-f32 PyTorch-equivalent math
    mean_f32, log_std_f32 = _reference_forward_f32(state, params)
    assert jnp.allclose(mean, mean_f32, atol=1e-1, rtol=1e-1)
    assert jnp.allclose(log_std, log_std_f32, atol=1e-1, rtol=1e-1)

    # TODO(synk): `sample()` (rsample + tanh squashing + log_prob) uses host-side
    # torch.distributions RNG; only the deterministic forward pass is kernelized.
    print("KERNEL_OK")
</pallas_src>

<mosaic_0001>
module attributes {stable_mosaic.version = 11 : i64} {
  func.func @_policy_kernel(%arg0: memref<8x6xf32, #tpu.memory_space<vmem>>, %arg1: memref<6x256xf32, #tpu.memory_space<vmem>>, %arg2: memref<3x256xf32, #tpu.memory_space<vmem>>, %arg3: memref<256x384xbf16, #tpu.memory_space<any>>, %arg4: memref<8x128xf32, #tpu.memory_space<vmem>>, %arg5: memref<256x384xbf16, #tpu.memory_space<vmem>>, %arg6: memref<!tpu.dma_semaphore, #tpu.memory_space<semaphore_mem>>) attributes {dimension_semantics = [], scalar_prefetch = 0 : i64, scratch_operands = 2 : i64, tpu.core_type = #tpu.core_type<tc>} {
    tpu.enqueue_dma source(%arg3 : memref<256x384xbf16, #tpu.memory_space<any>>) target(%arg5 : memref<256x384xbf16, #tpu.memory_space<vmem>>) target_semaphore(%arg6 : memref<!tpu.dma_semaphore, #tpu.memory_space<semaphore_mem>>)
    %c0 = arith.constant 0 : index
    %c0_0 = arith.constant 0 : index
    %0 = vector.load %arg2[%c0, %c0_0] : memref<3x256xf32, #tpu.memory_space<vmem>>, vector<3x256xf32>
    %1 = vector.extract_strided_slice %0 {offsets = [0, 0], sizes = [1, 256], strides = [1, 1]} : vector<3x256xf32> to vector<1x256xf32>
    %2 = vector.extract_strided_slice %0 {offsets = [1, 0], sizes = [1, 256], strides = [1, 1]} : vector<3x256xf32> to vector<1x256xf32>
    %3 = vector.extract_strided_slice %0 {offsets = [2, 0], sizes = [1, 128], strides = [1, 1]} : vector<3x256xf32> to vector<1x128xf32>
    %c0_1 = arith.constant 0 : index
    %c0_2 = arith.constant 0 : index
    %4 = vector.load %arg0[%c0_1, %c0_2] : memref<8x6xf32, #tpu.memory_space<vmem>>, vector<8x6xf32>
    %c0_3 = arith.constant 0 : index
    %c0_4 = arith.constant 0 : index
    %5 = vector.load %arg1[%c0_3, %c0_4] : memref<6x256xf32, #tpu.memory_space<vmem>>, vector<6x256xf32>
    %cst = arith.constant dense<0.000000e+00> : vector<8x256xf32>
    %6 = tpu.matmul %4, %5, %cst {dimension_numbers = #tpu.dot_dimension_numbers<[1], [0], [0], [1], [0, 0, 1, 1], [], []>} : vector<8x6xf32>, vector<6x256xf32>, vector<8x256xf32> -> vector<8x256xf32>
    %7 = vector.broadcast %1 : vector<1x256xf32> to vector<8x256xf32>
    %8 = arith.addf %6, %7 : vector<8x256xf32>
    %cst_5 = arith.constant 0.000000e+00 : f32
    %9 = vector.broadcast %cst_5 : f32 to vector<8x256xf32>
    %10 = arith.maximumf %8, %9 : vector<8x256xf32>
    %11 = arith.truncf %10 : vector<8x256xf32> to vector<8x256xbf16>
    tpu.wait_dma2 semaphore(%arg6 : memref<!tpu.dma_semaphore, #tpu.memory_space<semaphore_mem>>) src(%arg3 : memref<256x384xbf16, #tpu.memory_space<any>>) dst(%arg5 : memref<256x384xbf16, #tpu.memory_space<vmem>>)
    %c0_6 = arith.constant 0 : index
    %c0_7 = arith.constant 0 : index
    %12 = vector.load %arg5[%c0_6, %c0_7] : memref<256x384xbf16, #tpu.memory_space<vmem>>, vector<256x256xbf16>
    %cst_8 = arith.constant dense<0.000000e+00> : vector<8x256xf32>
    %13 = tpu.matmul %11, %12, %cst_8 {dimension_numbers = #tpu.dot_dimension_numbers<[1], [0], [0], [1], [0, 0, 1, 1], [], []>} : vector<8x256xbf16>, vector<256x256xbf16>, vector<8x256xf32> -> vector<8x256xf32>
    %14 = vector.broadcast %2 : vector<1x256xf32> to vector<8x256xf32>
    %15 = arith.addf %13, %14 : vector<8x256xf32>
    %cst_9 = arith.constant 0.000000e+00 : f32
    %16 = vector.broadcast %cst_9 : f32 to vector<8x256xf32>
    %17 = arith.maximumf %15, %16 : vector<8x256xf32>
    %18 = arith.truncf %17 : vector<8x256xf32> to vector<8x256xbf16>
    %c0_10 = arith.constant 0 : index
    %c256 = arith.constant 256 : index
    %19 = vector.load %arg5[%c0_10, %c256] : memref<256x384xbf16, #tpu.memory_space<vmem>>, vector<256x128xbf16>
    %cst_11 = arith.constant dense<0.000000e+00> : vector<8x128xf32>
    %20 = tpu.matmul %18, %19, %cst_11 {dimension_numbers = #tpu.dot_dimension_numbers<[1], [0], [0], [1], [0, 0, 1, 1], [], []>} : vector<8x256xbf16>, vector<256x128xbf16>, vector<8x128xf32> -> vector<8x128xf32>
    %21 = vector.broadcast %3 : vector<1x128xf32> to vector<8x128xf32>
    %22 = arith.addf %20, %21 : vector<8x128xf32>
    %23 = tpu.iota {dimensions = array<i32: 1>} : vector<8x128xi32>
    %c2_i32 = arith.constant 2 : i32
    %24 = vector.broadcast %c2_i32 : i32 to vector<8x128xi32>
    %25 = arith.cmpi sge, %23, %24 : vector<8x128xi32>
    %c4_i32 = arith.constant 4 : i32
    %26 = vector.broadcast %c4_i32 : i32 to vector<8x128xi32>
    %27 = arith.cmpi slt, %23, %26 : vector<8x128xi32>
    %28 = arith.andi %25, %27 : vector<8x128xi1>
    %cst_12 = arith.constant -2.000000e+01 : f32
    %cst_13 = arith.constant 2.000000e+00 : f32
    %29 = vector.broadcast %cst_12 : f32 to vector<8x128xf32>
    %30 = arith.maximumf %29, %22 : vector<8x128xf32>
    %31 = vector.broadcast %cst_13 : f32 to vector<8x128xf32>
    %32 = arith.minimumf %31, %30 : vector<8x128xf32>
    %33 = arith.select %28, %32, %22 : vector<8x128xi1>, vector<8x128xf32>
    %c0_14 = arith.constant 0 : index
    %c0_15 = arith.constant 0 : index
    %34 = vector.load %arg4[%c0_14, %c0_15] : memref<8x128xf32, #tpu.memory_space<vmem>>, vector<8x128xf32>
    tpu.vector_store %arg4[%c0_14, %c0_15], %33 {strides = array<i32>} : memref<8x128xf32, #tpu.memory_space<vmem>>, vector<8x128xf32>,
    return
  }
}

</mosaic_0001>

<llo_original>
// kernel: tpu_custom_call.1
$region0: #{tpu_custom_call.1}
  #allocation0 [shape = 'u32[]', space=smem, size = 0x4, offset = 0x4, fixed_abs, tag = 'smem constant byte address 0x4 - core index']
  #allocation1 [shape = 'u32[144,128]{1,0:T(1,128)}', space=vmem, size = 0x12000, scoped, tag = 'internal scratch']
  #allocation2 [shape = 'bf16[256,384]{1,0:T(8,128)(2,1)}', space=vmem, size = 0x30000, scoped, tag = 'scratch operand']
  #allocation3 [shape = 's32[1]{0}', space=sflag, size = 0x4, scoped, tag = 'scratch operand']
  #allocation11 [shape = 's32[]', space=sflag, size = 0x4, offset = 0, fixed_abs, tag = 'sflag constant byte address 0x0 - dummy sync flag']
  #allocation12 [shape = 's32[]', space=sflag, size = 0x4, offset = 0, fixed_abs, tag = 'sflag constant byte address 0x0 - dummy sync flag']
  #allocation13 [shape = 'u32[]', space=smem, size = 0x4, offset = 0x44, fixed_abs, tag = 'smem constant byte address 0x44 - assertion arg 0']
  #allocation14 [shape = 'u32[]', space=smem, size = 0x4, offset = 0x48, fixed_abs, tag = 'smem constant byte address 0x48 - assertion arg 1']
  %s0 = inlined_call_operand.hbm [shape: f32[8,6], index: 0, kind: input, shape index: {}]
  %s1 = inlined_call_operand.hbm [shape: f32[6,256], index: 1, kind: input, shape index: {}]
  %s2 = inlined_call_operand.hbm [shape: f32[3,256], index: 2, kind: input, shape index: {}]
  %s3 = inlined_call_operand.hbm [shape: bf16[256,384], index: 3, kind: input, shape index: {}]
  %s4 = inlined_call_operand.hbm [shape: f32[8,128], index: 4, kind: output, shape index: {}]
  %s5 = sld [smem:[#allocation0]]
  $region38: #{tpu_custom_call.1} parent=0
    _
  %s7 = ssub.s32 1, %s5
  %s8 = scalar_select 0, %s7, %s5
  $region1: #{tpu_custom_call.1} parent=0
    #allocation4 [shape = 'u8[4096]{0}', space=vmem, size = 0x1000, scoped, tag = 'input window, operand 0, single buffered']
    #allocation5 [shape = 's32[1]{0}', space=sflag, size = 0x4, scoped, tag = 'scoped memory for tpu_custom_call.1']
    #allocation6 [shape = 's32[1]{0}', space=sflag, size = 0x4, scoped, tag = 'scoped memory for tpu_custom_call.1']
    #allocation7 [shape = 'u8[8192]{0}', space=vmem, size = 0x2000, scoped, tag = 'input window, operand 1, single buffered']
    #allocation8 [shape = 's32[1]{0}', space=sflag, size = 0x4, scoped, tag = 'scoped memory for tpu_custom_call.1']
    #allocation9 [shape = 'u8[4096]{0}', space=vmem, size = 0x1000, scoped, tag = 'input window, operand 2, single buffered']
    #allocation10 [shape = 'u8[4096]{0}', space=vmem, size = 0x1000, scoped, tag = 'output window, operand 0, single buffered']
    %9 = vsyncpa [#allocation5], 0
    %10 = vsyncpa [#allocation8], 0
    %11 = vsyncpa [#allocation6], 0
    // Predicated region
    $region2: #{tpu_custom_call.1} parent=1 // pred_check
      _
    $region3: #{tpu_custom_call.1} parent=1 // pred_check_branch
      %13 = sbr.rel (0) target = $region5
    $region4: #{tpu_custom_call.1} parent=1 // pred_region
      %s15 = ssub.s32 128, 128
      %16 = vsyncadd [#allocation5], %s15
      %s18 = sshll.u32 [#allocation4], 4
      %s19 = int_to_ptr.vmem [resolvable:$true] %s18
      %21 = dma.hbm_to_vmem [thread:$0]  %s0, 128, %s19, [#allocation5]
    $region5: #{tpu_custom_call.1} parent=1 // pred_fallthru
      _
    // Predicated region
    $region6: #{tpu_custom_call.1} parent=1 // pred_check
      _
    $region7: #{tpu_custom_call.1} parent=1 // pred_check_branch
      %23 = sbr.rel (0) target = $region9
    $region8: #{tpu_custom_call.1} parent=1 // pred_region
      %s25 = ssub.s32 256, 256
      %26 = vsyncadd [#allocation8], %s25
      %s28 = sshll.u32 [#allocation7], 4
      %s29 = int_to_ptr.vmem [resolvable:$true] %s28
      %31 = dma.hbm_to_vmem [thread:$0]  %s1, 256, %s29, [#allocation8]
    $region9: #{tpu_custom_call.1} parent=1 // pred_fallthru
      _
    // Predicated region
    $region10: #{tpu_custom_call.1} parent=1 // pred_check
      _
    $region11: #{tpu_custom_call.1} parent=1 // pred_check_branch
      %33 = sbr.rel (0) target = $region13
    $region12: #{tpu_custom_call.1} parent=1 // pred_region
      %s35 = ssub.s32 128, 128
      %36 = vsyncadd [#allocation8], %s35
      %s38 = sshll.u32 [#allocation9], 4
      %s39 = int_to_ptr.vmem [resolvable:$true] %s38
      %41 = dma.hbm_to_vmem [thread:$0]  %s2, 128, %s39, [#allocation8]
    $region13: #{tpu_custom_call.1} parent=1 // pred_fallthru
      _
    // Predicated region
    $region14: #{tpu_custom_call.1} parent=1 // pred_check
      _
    $region15: #{tpu_custom_call.1} parent=1 // pred_check_branch
      %43 = sbr.rel (0) target = $region17
    $region16: #{tpu_custom_call.1} parent=1 // pred_region
      %44 = dma.done [#allocation5], 128
    $region17: #{tpu_custom_call.1} parent=1 // pred_fallthru
      _
    // Predicated region
    $region18: #{tpu_custom_call.1} parent=1 // pred_check
      _
    $region19: #{tpu_custom_call.1} parent=1 // pred_check_branch
      %46 = sbr.rel (0) target = $region21
    $region20: #{tpu_custom_call.1} parent=1 // pred_region
      %47 = dma.done [#allocation8], 256
    $region21: #{tpu_custom_call.1} parent=1 // pred_fallthru
      _
    // Predicated region
    $region22: #{tpu_custom_call.1} parent=1 // pred_check
      _
    $region23: #{tpu_custom_call.1} parent=1 // pred_check_branch
      %49 = sbr.rel (0) target = $region25
    $region24: #{tpu_custom_call.1} parent=1 // pred_region
      %50 = dma.done [#allocation8], 128
    $region25: #{tpu_custom_call.1} parent=1 // pred_fallthru
      _
    // Predicated region
    $region26: #{tpu_custom_call.1} parent=1 // pred_check
      _
    $region27: #{tpu_custom_call.1} parent=1 // pred_check_branch
      %53 = sbr.rel target = $region29
    $region28: #{tpu_custom_call.1} parent=1 // pred_region
      %54 = sst [smem:[#allocation13]] [#allocation12]
      %55 = sst [smem:[#allocation14]] [#allocation11]
    $region29: #{tpu_custom_call.1} parent=1 // pred_fallthru
      _
    %57 = shalt.err (0)
    %s59 = sshll.u32 [#allocation2], 4
    %s60 = int_to_ptr.vmem [resolvable:$true] %s59
    %62 = dma.hbm_to_vmem [thread:$0]  %s3, 6144, %s60, [#allocation3]
    %v63 = vld [vmem:[#allocation9] sm:$0x77]
    %v64 = vld [vmem:[#allocation4] sm:$0xff]
    %v65 = vld [vmem:[#allocation7] sm:$0x3f]
    %v66 = vld [vmem:[#allocation7 + $0x8] sm:$0x3f]
    %v68 = vlaneseq
    %v69 = vshrl.u32 %v68, 7
    %v70 = vsub.s32 0, %v69
    %v71 = vrot.slane %v63, %v70
    %v72 = vlaneseq
    %v73 = vshrl.u32 %v72, 7
    %v74 = vsub.s32 4, %v73
    %v75 = vrot.slane %v63, %v74
    %v78 = vlaneseq
    %v79 = vshrl.u32 %v78, 7
    %v80 = vsub.s32 0, %v79
    %v81 = vrot.slane %v71, %v80
    %v82 = vlaneseq
    %v83 = vshrl.u32 %v82, 7
    %v84 = vsub.s32 0, %v83
    %v85 = vrot.slane %v75, %v84
    %vm86 = vcmask 48128
    %v88 = vsel %vm86, %v64, 0
    %vm90 = vcmask 1045504
    %v92 = vsel %vm90, %v65, 0
    %v95 = vsel %vm90, %v66, 0
    %97 = vmatprep.subr.mxu0 0.0
    %98 = vmatpush1.msra.mxu0 0.0
    %99 = vmatprep.subr.mxu0 0.0
    %100 = vmatpush1.msra.mxu0 0.0
    %101 = vmatprep.subr.mxu0 0.0
    %102 = vmatpush1.msra.mxu0 0.0
    %103 = vmatprep.subr.mxu0 0.0
    %104 = vmatpush1.msra.mxu0 0.0
    %105 = vmatprep.subr.mxu0 0.0
    %106 = vmatpush1.msra.mxu0 0.0
    %107 = vmatprep.subr.mxu0 0.0
    %108 = vmatpush1.msra.mxu0 0.0
    %109 = vmatprep.subr.mxu0 0.0
    %110 = vmatpush1.msra.mxu0 0.0
    %111 = vmatprep.subr.mxu0 0.0
    %112 = vmatpush1.msra.mxu0 0.0
    %113 = vmatprep.subr.mxu0 0.0
    %114 = vmatpush1.msra.mxu0 0.0
    %115 = vmatprep.subr.mxu0 0.0
    %116 = vmatpush1.msra.mxu0 0.0
    %117 = vmatprep.subr.mxu0 0.0
    %118 = vmatpush1.msra.mxu0 0.0
    %119 = vmatprep.subr.mxu0 0.0
    %120 = vmatpush1.msra.mxu0 0.0
    %121 = vmatprep.subr.mxu0 0.0
    %122 = vmatpush1.msra.mxu0 0.0
    %123 = vmatprep.subr.mxu0 0.0
    %124 = vmatpush1.msra.mxu0 0.0
    %125 = vmatprep.subr.mxu0 0.0
    %126 = vmatpush1.msra.mxu0 0.0
    %127 = vmatprep.subr.mxu0 %v95
    %128 = vmatpush1.msra.mxu0 %v92
    %129 = vmatprep.subr.mxu0 0.0
    %130 = vmatpush2.msra.mxu0 0.0
    %131 = vmatprep.subr.mxu0 0.0
    %132 = vmatpush2.msra.mxu0 0.0
    %133 = vmatprep.subr.mxu0 0.0
    %134 = vmatpush2.msra.mxu0 0.0
    %135 = vmatprep.subr.mxu0 0.0
    %136 = vmatpush2.msra.mxu0 0.0
    %137 = vmatprep.subr.mxu0 0.0
    %138 = vmatpush2.msra.mxu0 0.0
    %139 = vmatprep.subr.mxu0 0.0
    %140 = vmatpush2.msra.mxu0 0.0
    %141 = vmatprep.subr.mxu0 0.0
    %142 = vmatpush2.msra.mxu0 0.0
    %143 = vmatprep.subr.mxu0 0.0
    %144 = vmatpush2.msra.mxu0 0.0
    %145 = vmatprep.subr.mxu0 0.0
    %146 = vmatpush2.msra.mxu0 0.0
    %147 = vmatprep.subr.mxu0 0.0
    %148 = vmatpush2.msra.mxu0 0.0
    %149 = vmatprep.subr.mxu0 0.0
    %150 = vmatpush2.msra.mxu0 0.0
    %151 = vmatprep.subr.mxu0 0.0
    %152 = vmatpush2.msra.mxu0 0.0
    %153 = vmatprep.subr.mxu0 0.0
    %154 = vmatpush2.msra.mxu0 0.0
    %155 = vmatprep.subr.mxu0 0.0
    %156 = vmatpush2.msra.mxu0 0.0
    %157 = vmatprep.subr.mxu0 0.0
    %158 = vmatpush2.msra.mxu0 0.0
    %159 = vmatprep.subr.mxu0 0.0
    %160 = vmatpush2.msra.mxu0 0.0
    %161 = vmatprep.mubr.f32.mxu0 0.0
    %162 = vmatmul.mubr.f32.gmra.mxu0 %v88
    %v163 = vpop.f32.mrf.mxu0
    %v164 = vadd.f32 %v81, %v163
    %v165 = vpop.f32.mrf.mxu0
    %v166 = vadd.f32 %v85, %v165
    %167 = vdwg.mxu0
    %v168 = vmax.f32 %v164, 0.0
    %v169 = vmax.f32 %v166, 0.0
    %v170 = vpack.c.bf16 %v168, %v168
    %v171 = vpack.c.bf16 %v169, %v169
    %s172 = smul.u32 4, 32
    %s173 = smul.u32 %s172, 3
    %s174 = sshll.u32 %s173, 4
    %175 = dma.done [#allocation3], %s174
    %v176 = vld [vmem:[#allocation2] sm:$0xff]
    %v177 = vld [vmem:[#allocation2 + $0xc] sm:$0xff]
    %v178 = vld [vmem:[#allocation2 + $0x18] sm:$0xff]
    %v179 = vld [vmem:[#allocation2 + $0x24] sm:$0xff]
    %v180 = vld [vmem:[#allocation2 + $0x30] sm:$0xff]
    %v181 = vld [vmem:[#allocation2 + $0x3c] sm:$0xff]
    %v182 = vld [vmem:[#allocation2 + $0x48] sm:$0xff]
    %v183 = vld [vmem:[#allocation2 + $0x54] sm:$0xff]
    %v184 = vld [vmem:[#allocation2 + $0x60] sm:$0xff]
    %v185 = vld [vmem:[#allocation2 + $0x6c] sm:$0xff]
    %v186 = vld [vmem:[#allocation2 + $0x78] sm:$0xff]
    %v187 = vld [vmem:[#allocation2 + $0x84] sm:$0xff]
    %v188 = vld [vmem:[#allocation2 + $0x90] sm:$0xff]
    %v189 = vld [vmem:[#allocation2 + $0x9c] sm:$0xff]
    %v190 = vld [vmem:[#allocation2 + $0xa8] sm:$0xff]
    %v191 = vld [vmem:[#allocation2 + $0xb4] sm:$0xff]
    %v192 = vld [vmem:[#allocation2 + $0xc0] sm:$0xff]
    %v193 = vld [vmem:[#allocation2 + $0xcc] sm:$0xff]
    %v194 = vld [vmem:[#allocation2 + $0xd8] sm:$0xff]
    %v195 = vld [vmem:[#allocation2 + $0xe4] sm:$0xff]
    %v196 = vld [vmem:[#allocation2 + $0xf0] sm:$0xff]
    %v197 = vld [vmem:[#allocation2 + $0xfc] sm:$0xff]
    %v198 = vld [vmem:[#allocation2 + $0x108] sm:$0xff]
    %v199 = vld [vmem:[#allocation2 + $0x114] sm:$0xff]
    %v200 = vld [vmem:[#allocation2 + $0x120] sm:$0xff]
    %v201 = vld [vmem:[#allocation2 + $0x12c] sm:$0xff]
    %v202 = vld [vmem:[#allocation2 + $0x138] sm:$0xff]
    %v203 = vld [vmem:[#allocation2 + $0x144] sm:$0xff]
    %v204 = vld [vmem:[#allocation2 + $0x150] sm:$0xff]
    %v205 = vld [vmem:[#allocation2 + $0x15c] sm:$0xff]
    %v206 = vld [vmem:[#allocation2 + $0x168] sm:$0xff]
    %v207 = vld [vmem:[#allocation2 + $0x174] sm:$0xff]
    %v208 = vlaneseq
    %v209 = vshrl.u32 %v208, 7
    %v210 = vsub.s32 1, %v209
    %v211 = vrot.slane %v63, %v210
    %v212 = vlaneseq
    %v213 = vshrl.u32 %v212, 7
    %v214 = vsub.s32 5, %v213
    %v215 = vrot.slane %v63, %v214
    %v218 = vlaneseq
    %v219 = vshrl.u32 %v218, 7
    %v220 = vsub.s32 1, %v219
    %v221 = vrot.slane %v211, %v220
    %v222 = vlaneseq
    %v223 = vshrl.u32 %v222, 7
    %v224 = vsub.s32 1, %v223
    %v225 = vrot.slane %v215, %v224
    %v258 = vunpack.c.l.b16 %v176
    %v259 = vunpack.c.h.b16 %v176
    %v260 = vunpack.c.l.b16 %v177
    %v261 = vunpack.c.h.b16 %v177
    %v262 = vunpack.c.l.b16 %v178
    %v263 = vunpack.c.h.b16 %v178
    %v264 = vunpack.c.l.b16 %v179
    %v265 = vunpack.c.h.b16 %v179
    %v266 = vunpack.c.l.b16 %v180
    %v267 = vunpack.c.h.b16 %v180
    %v268 = vunpack.c.l.b16 %v181
    %v269 = vunpack.c.h.b16 %v181
    %v270 = vunpack.c.l.b16 %v182
    %v271 = vunpack.c.h.b16 %v182
    %v272 = vunpack.c.l.b16 %v183
    %v273 = vunpack.c.h.b16 %v183
    %v274 = vunpack.c.l.b16 %v184
    %v275 = vunpack.c.h.b16 %v184
    %v276 = vunpack.c.l.b16 %v185
    %v277 = vunpack.c.h.b16 %v185
    %v278 = vunpack.c.l.b16 %v186
    %v279 = vunpack.c.h.b16 %v186
    %v280 = vunpack.c.l.b16 %v187
    %v281 = vunpack.c.h.b16 %v187
    %v282 = vunpack.c.l.b16 %v188
    %v283 = vunpack.c.h.b16 %v188
    %v284 = vunpack.c.l.b16 %v189
    %v285 = vunpack.c.h.b16 %v189
    %v286 = vunpack.c.l.b16 %v190
    %v287 = vunpack.c.h.b16 %v190
    %v288 = vunpack.c.l.b16 %v191
    %v289 = vunpack.c.h.b16 %v191
    %v290 = vunpack.c.l.b16 %v192
    %v291 = vunpack.c.h.b16 %v192
    %v292 = vunpack.c.l.b16 %v193
    %v293 = vunpack.c.h.b16 %v193
    %v294 = vunpack.c.l.b16 %v194
    %v295 = vunpack.c.h.b16 %v194
    %v296 = vunpack.c.l.b16 %v195
    %v297 = vunpack.c.h.b16 %v195
    %v298 = vunpack.c.l.b16 %v196
    %v299 = vunpack.c.h.b16 %v196
    %v300 = vunpack.c.l.b16 %v197
    %v301 = vunpack.c.h.b16 %v197
    %v302 = vunpack.c.l.b16 %v198
    %v303 = vunpack.c.h.b16 %v198
    %v304 = vunpack.c.l.b16 %v199
    %v305 = vunpack.c.h.b16 %v199
    %v306 = vunpack.c.l.b16 %v200
    %v307 = vunpack.c.h.b16 %v200
    %v308 = vunpack.c.l.b16 %v201
    %v309 = vunpack.c.h.b16 %v201
    %v310 = vunpack.c.l.b16 %v202
    %v311 = vunpack.c.h.b16 %v202
    %v312 = vunpack.c.l.b16 %v203
    %v313 = vunpack.c.h.b16 %v203
    %v314 = vunpack.c.l.b16 %v204
    %v315 = vunpack.c.h.b16 %v204
    %v316 = vunpack.c.l.b16 %v205
    %v317 = vunpack.c.h.b16 %v205
    %v318 = vunpack.c.l.b16 %v206
    %v319 = vunpack.c.h.b16 %v206
    %v320 = vunpack.c.l.b16 %v207
    %v321 = vunpack.c.h.b16 %v207
    %v322 = vpack.c.b16 %v260, %v258
    %v323 = vpack.c.b16 %v261, %v259
    %v324 = vpack.c.b16 %v264, %v262
    %v325 = vpack.c.b16 %v265, %v263
    %v326 = vpack.c.b16 %v268, %v266
    %v327 = vpack.c.b16 %v269, %v267
    %v328 = vpack.c.b16 %v272, %v270
    %v329 = vpack.c.b16 %v273, %v271
    %v330 = vpack.c.b16 %v276, %v274
    %v331 = vpack.c.b16 %v277, %v275
    %v332 = vpack.c.b16 %v280, %v278
    %v333 = vpack.c.b16 %v281, %v279
    %v334 = vpack.c.b16 %v284, %v282
    %v335 = vpack.c.b16 %v285, %v283
    %v336 = vpack.c.b16 %v288, %v286
    %v337 = vpack.c.b16 %v289, %v287
    %v338 = vpack.c.b16 %v292, %v290
    %v339 = vpack.c.b16 %v293, %v291
    %v340 = vpack.c.b16 %v296, %v294
    %v341 = vpack.c.b16 %v297, %v295
    %v342 = vpack.c.b16 %v300, %v298
    %v343 = vpack.c.b16 %v301, %v299
    %v344 = vpack.c.b16 %v304, %v302
    %v345 = vpack.c.b16 %v305, %v303
    %v346 = vpack.c.b16 %v308, %v306
    %v347 = vpack.c.b16 %v309, %v307
    %v348 = vpack.c.b16 %v312, %v310
    %v349 = vpack.c.b16 %v313, %v311
    %v350 = vpack.c.b16 %v316, %v314
    %v351 = vpack.c.b16 %v317, %v315
    %v352 = vpack.c.b16 %v320, %v318
    %v353 = vpack.c.b16 %v321, %v319
    %386 = vmatprep.subr.bf16.mxu0 %v337
    %387 = vmatpush1.bf16.msra.mxu0 %v336
    %388 = vmatprep.subr.bf16.mxu0 %v335
    %389 = vmatpush1.bf16.msra.mxu0 %v334
    %390 = vmatprep.subr.bf16.mxu0 %v333
    %391 = vmatpush1.bf16.msra.mxu0 %v332
    %392 = vmatprep.subr.bf16.mxu0 %v331
    %393 = vmatpush1.bf16.msra.mxu0 %v330
    %394 = vmatprep.subr.bf16.mxu0 %v329
    %395 = vmatpush1.bf16.msra.mxu0 %v328
    %396 = vmatprep.subr.bf16.mxu0 %v327
    %397 = vmatpush1.bf16.msra.mxu0 %v326
    %398 = vmatprep.subr.bf16.mxu0 %v325
    %399 = vmatpush1.bf16.msra.mxu0 %v324
    %400 = vmatprep.subr.bf16.mxu0 %v323
    %401 = vmatpush1.bf16.msra.mxu0 %v322
    %402 = vmatprep.subr.bf16.mxu0 %v353
    %403 = vmatpush2.bf16.msra.mxu0 %v352
    %404 = vmatprep.subr.bf16.mxu0 %v351
    %405 = vmatpush2.bf16.msra.mxu0 %v350
    %406 = vmatprep.subr.bf16.mxu0 %v349
    %407 = vmatpush2.bf16.msra.mxu0 %v348
    %408 = vmatprep.subr.bf16.mxu0 %v347
    %409 = vmatpush2.bf16.msra.mxu0 %v346
    %410 = vmatprep.subr.bf16.mxu0 %v345
    %411 = vmatpush2.bf16.msra.mxu0 %v344
    %412 = vmatprep.subr.bf16.mxu0 %v343
    %413 = vmatpush2.bf16.msra.mxu0 %v342
    %414 = vmatprep.subr.bf16.mxu0 %v341
    %415 = vmatpush2.bf16.msra.mxu0 %v340
    %416 = vmatprep.subr.bf16.mxu0 %v339
    %417 = vmatpush2.bf16.msra.mxu0 %v338
    %418 = vmatprep.mubr.bf16.mxu0 %v171
    %419 = vmatmul.mubr.bf16.gmra.mxu0 %v170
    %v420 = vpop.f32.mrf.mxu0
    %v421 = vadd.f32 %v221, %v420
    %v422 = vpop.f32.mrf.mxu0
    %v423 = vadd.f32 %v225, %v422
    %v424 = vpop.f32.mrf.mxu0
    %v425 = vpop.f32.mrf.mxu0
    %426 = vdwg.mxu0
    %v427 = vmax.f32 %v421, 0.0
    %v428 = vmax.f32 %v423, 0.0
    %v429 = vpack.c.bf16 %v427, %v427
    %v430 = vpack.c.bf16 %v428, %v428
    %v431 = vld [vmem:[#allocation2 + $0x8] sm:$0xf]
    %v432 = vld [vmem:[#allocation2 + $0x14] sm:$0xf]
    %v433 = vld [vmem:[#allocation2 + $0x20] sm:$0xf]
    %v434 = vld [vmem:[#allocation2 + $0x2c] sm:$0xf]
    %v435 = vld [vmem:[#allocation2 + $0x38] sm:$0xf]
    %v436 = vld [vmem:[#allocation2 + $0x44] sm:$0xf]
    %v437 = vld [vmem:[#allocation2 + $0x50] sm:$0xf]
    %v438 = vld [vmem:[#allocation2 + $0x5c] sm:$0xf]
    %v439 = vld [vmem:[#allocation2 + $0x68] sm:$0xf]
    %v440 = vld [vmem:[#allocation2 + $0x74] sm:$0xf]
    %v441 = vld [vmem:[#allocation2 + $0x80] sm:$0xf]
    %v442 = vld [vmem:[#allocation2 + $0x8c] sm:$0xf]
    %v443 = vld [vmem:[#allocation2 + $0x98] sm:$0xf]
    %v444 = vld [vmem:[#allocation2 + $0xa4] sm:$0xf]
    %v445 = vld [vmem:[#allocation2 + $0xb0] sm:$0xf]
    %v446 = vld [vmem:[#allocation2 + $0xbc] sm:$0xf]
    %v447 = vld [vmem:[#allocation2 + $0xc8] sm:$0xf]
    %v448 = vld [vmem:[#allocation2 + $0xd4] sm:$0xf]
    %v449 = vld [vmem:[#allocation2 + $0xe0] sm:$0xf]
    %v450 = vld [vmem:[#allocation2 + $0xec] sm:$0xf]
    %v451 = vld [vmem:[#allocation2 + $0xf8] sm:$0xf]
    %v452 = vld [vmem:[#allocation2 + $0x104] sm:$0xf]
    %v453 = vld [vmem:[#allocation2 + $0x110] sm:$0xf]
    %v454 = vld [vmem:[#allocation2 + $0x11c] sm:$0xf]
    %v455 = vld [vmem:[#allocation2 + $0x128] sm:$0xf]
    %v456 = vld [vmem:[#allocation2 + $0x134] sm:$0xf]
    %v457 = vld [vmem:[#allocation2 + $0x140] sm:$0xf]
    %v458 = vld [vmem:[#allocation2 + $0x14c] sm:$0xf]
    %v459 = vld [vmem:[#allocation2 + $0x158] sm:$0xf]
    %v460 = vld [vmem:[#allocation2 + $0x164] sm:$0xf]
    %v461 = vld [vmem:[#allocation2 + $0x170] sm:$0xf]
    %v462 = vld [vmem:[#allocation2 + $0x17c] sm:$0xf]
    %v463 = vlaneseq
    %v464 = vshrl.u32 %v463, 7
    %v465 = vsub.s32 2, %v464
    %v466 = vrot.slane %v63, %v465
    %v499 = vunpack.c.l.b16 %v431
    %v500 = vunpack.c.l.b16 %v432
    %v501 = vunpack.c.l.b16 %v433
    %v502 = vunpack.c.l.b16 %v434
    %v503 = vunpack.c.l.b16 %v435
    %v504 = vunpack.c.l.b16 %v436
    %v505 = vunpack.c.l.b16 %v437
    %v506 = vunpack.c.l.b16 %v438
    %v507 = vunpack.c.l.b16 %v439
    %v508 = vunpack.c.l.b16 %v440
    %v509 = vunpack.c.l.b16 %v441
    %v510 = vunpack.c.l.b16 %v442
    %v511 = vunpack.c.l.b16 %v443
    %v512 = vunpack.c.l.b16 %v444
    %v513 = vunpack.c.l.b16 %v445
    %v514 = vunpack.c.l.b16 %v446
    %v515 = vunpack.c.l.b16 %v447
    %v516 = vunpack.c.l.b16 %v448
    %v517 = vunpack.c.l.b16 %v449
    %v518 = vunpack.c.l.b16 %v450
    %v519 = vunpack.c.l.b16 %v451
    %v520 = vunpack.c.l.b16 %v452
    %v521 = vunpack.c.l.b16 %v453
    %v522 = vunpack.c.l.b16 %v454
    %v523 = vunpack.c.l.b16 %v455
    %v524 = vunpack.c.l.b16 %v456
    %v525 = vunpack.c.l.b16 %v457
    %v526 = vunpack.c.l.b16 %v458
    %v527 = vunpack.c.l.b16 %v459
    %v528 = vunpack.c.l.b16 %v460
    %v529 = vunpack.c.l.b16 %v461
    %v530 = vunpack.c.l.b16 %v462
    %v531 = vpack.c.b16 %v500, %v499
    %v532 = vpack.c.b16 %v502, %v501
    %v533 = vpack.c.b16 %v504, %v503
    %v534 = vpack.c.b16 %v506, %v505
    %v535 = vpack.c.b16 %v508, %v507
    %v536 = vpack.c.b16 %v510, %v509
    %v537 = vpack.c.b16 %v512, %v511
    %v538 = vpack.c.b16 %v514, %v513
    %v539 = vpack.c.b16 %v516, %v515
    %v540 = vpack.c.b16 %v518, %v517
    %v541 = vpack.c.b16 %v520, %v519
    %v542 = vpack.c.b16 %v522, %v521
    %v543 = vpack.c.b16 %v524, %v523
    %v544 = vpack.c.b16 %v526, %v525
    %v545 = vpack.c.b16 %v528, %v527
    %v546 = vpack.c.b16 %v530, %v529
    %563 = vmatprep.subr.bf16.mxu0 0
    %564 = vmatpush1.bf16.msra.mxu0 %v538
    %565 = vmatprep.subr.bf16.mxu0 0
    %566 = vmatpush1.bf16.msra.mxu0 %v537
    %567 = vmatprep.subr.bf16.mxu0 0
    %568 = vmatpush1.bf16.msra.mxu0 %v536
    %569 = vmatprep.subr.bf16.mxu0 0
    %570 = vmatpush1.bf16.msra.mxu0 %v535
    %571 = vmatprep.subr.bf16.mxu0 0
    %572 = vmatpush1.bf16.msra.mxu0 %v534
    %573 = vmatprep.subr.bf16.mxu0 0
    %574 = vmatpush1.bf16.msra.mxu0 %v533
    %575 = vmatprep.subr.bf16.mxu0 0
    %576 = vmatpush1.bf16.msra.mxu0 %v532
    %577 = vmatprep.subr.bf16.mxu0 0
    %578 = vmatpush1.bf16.msra.mxu0 %v531
    %579 = vmatprep.subr.bf16.mxu0 0
    %580 = vmatpush2.bf16.msra.mxu0 %v546
    %581 = vmatprep.subr.bf16.mxu0 0
    %582 = vmatpush2.bf16.msra.mxu0 %v545
    %583 = vmatprep.subr.bf16.mxu0 0
    %584 = vmatpush2.bf16.msra.mxu0 %v544
    %585 = vmatprep.subr.bf16.mxu0 0
    %586 = vmatpush2.bf16.msra.mxu0 %v543
    %587 = vmatprep.subr.bf16.mxu0 0
    %588 = vmatpush2.bf16.msra.mxu0 %v542
    %589 = vmatprep.subr.bf16.mxu0 0
    %590 = vmatpush2.bf16.msra.mxu0 %v541
    %591 = vmatprep.subr.bf16.mxu0 0
    %592 = vmatpush2.bf16.msra.mxu0 %v540
    %593 = vmatprep.subr.bf16.mxu0 0
    %594 = vmatpush2.bf16.msra.mxu0 %v539
    %595 = vmatprep.mubr.bf16.mxu0 %v430
    %596 = vmatmul.mubr.bf16.gmra.mxu0 %v429
    %v597 = vpop.f32.mrf.mxu0
    %v598 = vadd.f32 %v466, %v597
    %v599 = vpop.f32.mrf.mxu0
    %v600 = vpop.f32.mrf.mxu0
    %v601 = vpop.f32.mrf.mxu0
    %602 = vdwg.mxu0
    %v603 = vlaneseq
    %v604 = vand.u32 %v603, 127
    %vm605 = vcmp.ge.s32.totalorder %v604, 2
    %vm606 = vcmp.lt.s32.totalorder %v604, 4
    %vm607 = vmand %vm605, %vm606
    %v608 = vmax.f32 %v598, -20.0
    %v609 = vmin.f32 %v608, 2.0
    %v610 = vsel %vm607, %v609, %v598
    %611 = vst [vmem:[#allocation10] sm:$0xff] %v610
    // Predicated region
    $region30: #{tpu_custom_call.1} parent=1 // pred_check
      _
    $region31: #{tpu_custom_call.1} parent=1 // pred_check_branch
      %613 = sbr.rel (0) target = $region33
    $region32: #{tpu_custom_call.1} parent=1 // pred_region
      %s615 = ssub.s32 128, 128
      %616 = vsyncadd [#allocation6], %s615
      %s618 = sshll.u32 [#allocation10], 4
      %s619 = int_to_ptr.vmem [resolvable:$true] %s618
      %621 = dma.vmem_to_hbm [thread:$0]  %s619, 128, %s4, [#allocation6]
    $region33: #{tpu_custom_call.1} parent=1 // pred_fallthru
      _
    // Predicated region
    $region34: #{tpu_custom_call.1} parent=1 // pred_check
      _
    $region35: #{tpu_custom_call.1} parent=1 // pred_check_branch
      %623 = sbr.rel (0) target = $region37
    $region36: #{tpu_custom_call.1} parent=1 // pred_region
      %624 = dma.done [#allocation6], 128
    $region37: #{tpu_custom_call.1} parent=1 // pred_fallthru
      _
    %625 = vsyncpa [#allocation5], 1
    %626 = vsyncpa [#allocation8], 1
    %627 = vsyncpa [#allocation6], 1
  %628 = vsyncmov [#allocation3]
  %s629 = vpop.sfrf %628
  %p630 = scmp.eq.s32.totalorder %s629, 0
  %p631 = pneg %p630
  %633 = shalt.err (%p631)

</llo_original>
